<compile_context>
chip_gen: v7x
topology: tpu7x:2x2x1
jax: 0.10.0
libtpu: 0.0.40
codegen_flags: <defaults>
</compile_context>

<pallas_src>
import math
from typing import NamedTuple, Optional

import jax
import jax.numpy as jnp
from jax.experimental import pallas as pl
from jax.experimental.pallas import tpu as pltpu


def _round_up(x, m):
    return (x + m - 1) // m * m


def _pick_row_tile(total, pref=512):
    """Largest of (pref, 256, 128) that divides `total` (a multiple of 128)."""
    for t in (pref, 256, 128):
        if t <= total and total % t == 0:
            return t
    return total


def _tile_config(n, tm, tk):
    n128 = _round_up(n, 128)
    tm = min(_round_up(tm, 128), n128)
    tk = min(_round_up(tk, 128), n128)
    # v7x: only the "parallel" row axis is sharded across the two TensorCores.
    # If the row axis would collapse to a single tile and splitting costs no
    # extra padding, halve the row tile so both cores get work.
    if n128 // tm < 2 and n128 >= 256 and (n128 // 2) % 128 == 0:
        tm = n128 // 2
    n_rows = _round_up(n, tm)
    n_cols = _round_up(n, tk)
    return tm, tk, n_rows, n_cols


def _vmem_limit(est_bytes):
    # v5e's scoped-VMEM default is 16 MiB (vs 32 MiB v6e/v7x); raise it so the
    # larger double-buffered tiles keep their buffering.  Cap at 64 MiB.
    return int(min(64 * 1024 * 1024, max(32 * 1024 * 1024, 2 * est_bytes)))


class PreparedAdj(NamedTuple):
    adj_p: jax.Array   # [n_rows, n_cols] bf16, zero padded
    n: int
    tm: int
    tk: int


def prepare_adj(adj, *, tm=512, tk=1024):
    """Cast + pad the dense normalized adjacency ONCE; reuse across layers.

    Hoisted out of the per-layer call: the kernel is HBM-bound on streaming
    adj, and a per-call f32->bf16 cast+pad pass costs ~3x the kernel's own
    adjacency traffic.
    """
    n, n2 = adj.shape
    assert n == n2, "adjacency must be square"
    tm, tk, n_rows, n_cols = _tile_config(n, tm, tk)
    adj_p = jnp.pad(adj.astype(jnp.bfloat16),
                    ((0, n_rows - n), (0, n_cols - n)))
    # TODO(synk): on v7x the adjacency (values in [0,1]) could be streamed as
    # fp8 e4m3 to halve the dominant HBM stream; gate via pltpu.get_tpu_info.
    return PreparedAdj(adj_p, n, tm, tk)


# --------------------------------------------------------------------------
# Kernel 1: small feature matmul  out = A @ W (+bias)  (grid over row tiles)
# --------------------------------------------------------------------------
def _make_feature_matmul_kernel(has_bias, activation):
    def kernel(*refs):
        if has_bias:
            a_ref, w_ref, b_ref, o_ref = refs
        else:
            a_ref, w_ref, o_ref = refs
            b_ref = None
        out = jnp.dot(a_ref[...], w_ref[...],
                      preferred_element_type=jnp.float32)
        if b_ref is not None:
            out = out + b_ref[...]              # f32 bias add (VPU)
        if activation is not None:
            out = activation(out)
        o_ref[...] = out.astype(o_ref.dtype)
    return kernel


def _feature_matmul(a_bf16, w_bf16, bias_f32, out_dtype, activation):
    rows, kdim = a_bf16.shape
    kdim2, m = w_bf16.shape
    assert kdim == kdim2
    ts = _pick_row_tile(rows)
    has_bias = bias_f32 is not None

    operands = [a_bf16, w_bf16]
    in_specs = [pl.BlockSpec((ts, kdim), lambda i: (i, 0)),
                pl.BlockSpec((kdim, m), lambda i: (0, 0))]
    if has_bias:
        operands.append(bias_f32)
        in_specs.append(pl.BlockSpec((1, m), lambda i: (0, 0)))

    out_bytes = jnp.dtype(out_dtype).itemsize
    flops = 2 * rows * kdim * m
    bytes_accessed = (rows * kdim * 2
                      + (rows // ts) * kdim * m * 2   # weight re-read / tile
                      + rows * m * out_bytes
                      + (m * 4 if has_bias else 0))
    vmem_est = 2 * (ts * kdim * 2) + 2 * (kdim * m * 2) + 2 * (ts * m * out_bytes)

    return pl.pallas_call(
        _make_feature_matmul_kernel(has_bias, activation),
        out_shape=jax.ShapeDtypeStruct((rows, m), out_dtype),
        grid_spec=pltpu.PrefetchScalarGridSpec(
            num_scalar_prefetch=0,
            grid=(rows // ts,),
            in_specs=in_specs,
            out_specs=pl.BlockSpec((ts, m), lambda i: (i, 0)),
        ),
        compiler_params=pltpu.CompilerParams(
            dimension_semantics=("parallel",),
            vmem_limit_bytes=_vmem_limit(vmem_est)),
        cost_estimate=pl.CostEstimate(
            flops=flops, transcendentals=0, bytes_accessed=bytes_accessed),
    )(*operands)


# --------------------------------------------------------------------------
# Kernel 2: adjacency aggregation  out = adj @ S (+bias)
#   grid = (row_tiles, k_tiles); adj tiles streamed, f32 accumulator scratch,
#   reduction axis last and "arbitrary", row axis "parallel".
# --------------------------------------------------------------------------
def _make_adj_agg_kernel(has_bias, activation):
    def kernel(*refs):
        if has_bias:
            s_ref, adj_ref, b_ref, o_ref, acc_ref = refs
        else:
            s_ref, adj_ref, o_ref, acc_ref = refs
            b_ref = None

        k = pl.program_id(1)

        @pl.when(k == 0)
        def _init():
            acc_ref[...] = jnp.zeros_like(acc_ref)

        # acc += A[i_tile, k_tile] @ S[k_tile]   (bf16 MXU, f32 accumulation)
        acc_ref[...] += jnp.dot(adj_ref[...], s_ref[...],
                                preferred_element_type=jnp.float32)

        @pl.when(k == pl.num_programs(1) - 1)
        def _finalize():
            out = acc_ref[...]
            if b_ref is not None:
                out = out + b_ref[...]          # f32 bias add
            if activation is not None:
                out = activation(out)
            o_ref[...] = out.astype(o_ref.dtype)
    return kernel


def _adj_aggregate(adj_p, s_bf16, bias_f32, tm, tk, out_dtype, activation):
    n_rows, n_cols = adj_p.shape
    n_cols2, m = s_bf16.shape
    assert n_cols == n_cols2
    has_bias = bias_f32 is not None

    operands = [s_bf16, adj_p]
    in_specs = [pl.BlockSpec((tk, m), lambda i, k: (k, 0)),     # streamed S tile
                pl.BlockSpec((tm, tk), lambda i, k: (i, k))]    # streamed adj tile
    if has_bias:
        operands.append(bias_f32)
        in_specs.append(pl.BlockSpec((1, m), lambda i, k: (0, 0)))

    out_bytes = jnp.dtype(out_dtype).itemsize
    flops = 2 * n_rows * n_cols * m
    bytes_accessed = (n_rows * n_cols * 2                      # adj once
                      + (n_rows // tm) * n_cols * m * 2        # S re-read per row tile
                      + n_rows * m * out_bytes
                      + (m * 4 if has_bias else 0))
    vmem_est = (2 * (tm * tk * 2) + 2 * (tk * m * 2)
                + tm * m * 4 + 2 * (tm * m * out_bytes) + m * 4)

    return pl.pallas_call(
        _make_adj_agg_kernel(has_bias, activation),
        out_shape=jax.ShapeDtypeStruct((n_rows, m), out_dtype),
        grid_spec=pltpu.PrefetchScalarGridSpec(
            num_scalar_prefetch=0,
            grid=(n_rows // tm, n_cols // tk),
            in_specs=in_specs,
            out_specs=pl.BlockSpec((tm, m), lambda i, k: (i, 0)),
            scratch_shapes=[pltpu.VMEM((tm, m), jnp.float32)],
        ),
        compiler_params=pltpu.CompilerParams(
            dimension_semantics=("parallel", "arbitrary"),
            vmem_limit_bytes=_vmem_limit(vmem_est)),
        cost_estimate=pl.CostEstimate(
            flops=flops, transcendentals=0, bytes_accessed=bytes_accessed),
    )(*operands)


# --------------------------------------------------------------------------
# Layer wrapper (forward semantics of GraphConvolution.forward)
# --------------------------------------------------------------------------
def graph_convolution(x, adj, weight, bias=None, *, out_dtype=jnp.float32,
                      activation=None, tm=512, tk=1024):
    """Pallas GCN layer forward.

    x:      [N, F_in]  float32 (or bf16 when chaining layers)
    adj:    [N, N] dense normalized adjacency, OR a PreparedAdj (preferred:
            prepare once with `prepare_adj` and reuse across layers/steps).
    weight: [F_in, F_out], bias: [F_out] or None.
    Returns [N, F_out] in `out_dtype` (use bf16 when feeding another layer).
    """
    n, f_in = x.shape
    f_in_w, f_out = weight.shape
    assert f_in_w == f_in, "weight shape mismatch"

    if isinstance(adj, PreparedAdj):
        prepared = adj
        assert prepared.n == n, "prepared adjacency size mismatch"
    else:
        prepared = prepare_adj(adj, tm=tm, tk=tk)
    adj_p, _, tm, tk = prepared
    n_rows, n_cols = adj_p.shape

    f_in_pad = _round_up(f_in, 128)
    f_out_pad = _round_up(f_out, 128)

    # Operand prep (cheap, O(N*F)): bf16 MXU inputs, lane-dense feature dims,
    # node rows padded to the adjacency contraction extent.
    x_p = jnp.pad(x.astype(jnp.bfloat16),
                  ((0, n_cols - n), (0, f_in_pad - f_in)))
    w_p = jnp.pad(weight.astype(jnp.bfloat16),
                  ((0, f_in_pad - f_in), (0, f_out_pad - f_out)))
    b_p = None
    if bias is not None:
        b_p = jnp.pad(bias.astype(jnp.float32),
                      (0, f_out_pad - f_out)).reshape(1, f_out_pad)

    if f_out <= f_in:
        # Path A: support = X @ W once (bf16 intermediate), then aggregate.
        support = _feature_matmul(x_p, w_p, None, jnp.bfloat16, None)
        out = _adj_aggregate(adj_p, support, b_p, tm, tk, out_dtype, activation)
    else:
        # Path B: aggregate first (N^2 matmul contracts the smaller F_in),
        # then apply the weight.  Intermediate rounded to bf16 (documented).
        agg = _adj_aggregate(adj_p, x_p, None, tm, tk, jnp.bfloat16, None)
        out = _feature_matmul(agg, w_p, b_p, out_dtype, activation)

    return out[:n, :f_out]


def init_params(key, in_features, out_features, bias=True):
    """Matches GraphConvolution.reset_parameters: uniform(-stdv, stdv),
    stdv = 1/sqrt(out_features)."""
    stdv = 1.0 / math.sqrt(out_features)
    kw, kb = jax.random.split(key)
    weight = jax.random.uniform(kw, (in_features, out_features),
                                dtype=jnp.float32, minval=-stdv, maxval=stdv)
    b = None
    if bias:
        b = jax.random.uniform(kb, (out_features,), dtype=jnp.float32,
                               minval=-stdv, maxval=stdv)
    return weight, b


if __name__ == "__main__":
    key = jax.random.PRNGKey(0)
    k_x, k_adj, k_p1, k_p2 = jax.random.split(key, 4)

    N = 256
    F_IN = 192      # non-multiple of 128 -> exercises feature padding
    F_HID = 64      # F_out < F_in  -> adj @ (X @ W) path
    F_OUT2 = 96     # F_out > F_in  -> (adj @ X) @ W path

    x = jax.random.normal(k_x, (N, F_IN), dtype=jnp.float32)

    # Small deterministic symmetric normalized adjacency (dense).
    raw = jax.random.uniform(k_adj, (N, N), dtype=jnp.float32)
    a = (raw > 0.9).astype(jnp.float32)
    a = jnp.maximum(a, a.T) + jnp.eye(N, dtype=jnp.float32)       # A + I
    deg = jnp.sum(a, axis=1)
    d_inv_sqrt = 1.0 / jnp.sqrt(deg)
    adj = a * d_inv_sqrt[:, None] * d_inv_sqrt[None, :]           # D^-1/2 (A+I) D^-1/2

    # Hoisted: cast + pad the adjacency ONCE, reused by both layers below.
    # Small tiles here only to exercise the (parallel x arbitrary) grid and
    # the k-accumulator at this toy size; production defaults are 512x1024.
    adj_prep = prepare_adj(adj, tm=128, tk=128)

    # Layer 1: bias=True, F_out < F_in (support-first path).
    w1, b1 = init_params(k_p1, F_IN, F_HID, bias=True)
    out1 = jax.block_until_ready(graph_convolution(x, adj_prep, w1, b1))
    ref1 = adj @ (x @ w1) + b1[None, :]
    assert out1.shape == (N, F_HID)
    # bf16 MXU inputs with f32 accumulation -> loose tolerance vs f32 ref.
    assert jnp.allclose(out1, ref1, atol=5e-2, rtol=5e-2), "layer-1 mismatch"

    # Layer 2: bias=None, F_out > F_in (aggregate-first / no-bias path),
    # reusing the same prepared adjacency.
    w2, _ = init_params(k_p2, F_HID, F_OUT2, bias=False)
    out2 = jax.block_until_ready(graph_convolution(out1, adj_prep, w2, None))
    ref2 = adj @ (out1 @ w2)
    assert out2.shape == (N, F_OUT2)
    assert jnp.allclose(out2, ref2, atol=5e-2, rtol=5e-2), "layer-2 mismatch"

    print("KERNEL_OK")
</pallas_src>

<mosaic_0001>
module attributes {stable_mosaic.version = 11 : i64} {
  func.func @kernel(%arg0: i32, %arg1: memref<256x256xbf16, #tpu.memory_space<vmem>>, %arg2: memref<256x128xbf16, #tpu.memory_space<vmem>>, %arg3: memref<256x128xbf16, #tpu.memory_space<vmem>>) attributes {dimension_semantics = [#tpu.dimension_semantics<parallel>], iteration_bounds = array<i64: 1>, scalar_prefetch = 0 : i64, scratch_operands = 0 : i64, tpu.core_type = #tpu.core_type<tc>, window_params = [{transform_indices = @transform_0, window_bounds = array<i64: 256, 256>}, {pipeline_mode = #tpu.pipeline_mode<synchronous>, transform_indices = @transform_1, window_bounds = array<i64: 256, 128>}, {transform_indices = @transform_2, window_bounds = array<i64: 256, 128>}]} {
    %c0 = arith.constant 0 : index
    %c0_0 = arith.constant 0 : index
    %0 = vector.load %arg1[%c0, %c0_0] : memref<256x256xbf16, #tpu.memory_space<vmem>>, vector<256x256xbf16>
    %c0_1 = arith.constant 0 : index
    %c0_2 = arith.constant 0 : index
    %1 = vector.load %arg2[%c0_1, %c0_2] : memref<256x128xbf16, #tpu.memory_space<vmem>>, vector<256x128xbf16>
    %cst = arith.constant dense<0.000000e+00> : vector<256x128xf32>
    %2 = tpu.matmul %0, %1, %cst {dimension_numbers = #tpu.dot_dimension_numbers<[1], [0], [0], [1], [0, 0, 1, 1], [], []>} : vector<256x256xbf16>, vector<256x128xbf16>, vector<256x128xf32> -> vector<256x128xf32>
    %3 = arith.truncf %2 : vector<256x128xf32> to vector<256x128xbf16>
    %c0_3 = arith.constant 0 : index
    %c0_4 = arith.constant 0 : index
    %4 = vector.load %arg3[%c0_3, %c0_4] : memref<256x128xbf16, #tpu.memory_space<vmem>>, vector<256x128xbf16>
    tpu.vector_store %arg3[%c0_3, %c0_4], %3 {strides = array<i32>} : memref<256x128xbf16, #tpu.memory_space<vmem>>, vector<256x128xbf16>,
    return
  }
  func.func @transform_0(%arg0: i32) -> (i32, i32) {
    %c0_i32 = arith.constant 0 : i32
    %c0_i32_0 = arith.constant 0 : i32
    return %arg0, %c0_i32 : i32, i32
  }
  func.func @transform_1(%arg0: i32) -> (i32, i32) {
    %c0_i32 = arith.constant 0 : i32
    %c0_i32_0 = arith.constant 0 : i32
    %c0_i32_1 = arith.constant 0 : i32
    return %c0_i32, %c0_i32_0 : i32, i32
  }
  func.func @transform_2(%arg0: i32) -> (i32, i32) {
    %c0_i32 = arith.constant 0 : i32
    %c0_i32_0 = arith.constant 0 : i32
    return %arg0, %c0_i32 : i32, i32
  }
}

</mosaic_0001>

<llo_original>
// kernel: tpu_custom_call.1
$region0: #{tpu_custom_call.1}
  #allocation0 [shape = 'u32[]', space=smem, size = 0x4, offset = 0x4, fixed_abs, tag = 'smem constant byte address 0x4 - core index']
  #allocation1 [shape = 'u32[144,128]{1,0:T(1,128)}', space=vmem, size = 0x12000, scoped, tag = 'internal scratch']
  %s0 = inlined_call_operand.hbm [shape: bf16[256,256], index: 0, kind: input, shape index: {}]
  %s1 = inlined_call_operand.hbm [shape: bf16[256,128], index: 1, kind: input, shape index: {}]
  %s2 = inlined_call_operand.hbm [shape: bf16[256,128], index: 2, kind: output, shape index: {}]
  %s3 = sld [smem:[#allocation0]]
  $region26: #{tpu_custom_call.1} parent=0
    _
  %s5 = ssub.s32 1, %s3
  %s6 = scalar_select 0, %s5, %s3
  $region1: #{tpu_custom_call.1} parent=0
    #allocation2 [shape = 'u8[131072]{0}', space=vmem, size = 0x20000, scoped, tag = 'input window, operand 0, single buffered']
    #allocation3 [shape = 's32[1]{0}', space=sflag, size = 0x4, scoped, tag = 'scoped memory for tpu_custom_call.1']
    #allocation4 [shape = 's32[1]{0}', space=sflag, size = 0x4, scoped, tag = 'scoped memory for tpu_custom_call.1']
    #allocation5 [shape = 'u8[65536]{0}', space=vmem, size = 0x10000, scoped, tag = 'input window, operand 1, single buffered']
    #allocation6 [shape = 's32[1]{0}', space=sflag, size = 0x4, scoped, tag = 'scoped memory for tpu_custom_call.1']
    #allocation7 [shape = 'u8[65536]{0}', space=vmem, size = 0x10000, scoped, tag = 'output window, operand 0, single buffered']
    %7 = vsyncpa [#allocation3], 0
    %8 = vsyncpa [#allocation6], 0
    %9 = vsyncpa [#allocation4], 0
    // Predicated region
    $region2: #{tpu_custom_call.1} parent=1 // pred_check
      _
    $region3: #{tpu_custom_call.1} parent=1 // pred_check_branch
      %11 = sbr.rel (0) target = $region5
    $region4: #{tpu_custom_call.1} parent=1 // pred_region
      %s13 = ssub.s32 4096, 4096
      %14 = vsyncadd [#allocation3], %s13
      %s15 = sshll.u32 [#allocation2], 4
      %s16 = int_to_ptr.vmem [resolvable:$true] %s15
      %21 = dma.hbm_to_vmem [thread:$0]  %s0, 4096, %s16, [#allocation3], 128, 128, 8
    $region5: #{tpu_custom_call.1} parent=1 // pred_fallthru
      _
    // Predicated region
    $region6: #{tpu_custom_call.1} parent=1 // pred_check
      _
    $region7: #{tpu_custom_call.1} parent=1 // pred_check_branch
      %23 = sbr.rel (0) target = $region9
    $region8: #{tpu_custom_call.1} parent=1 // pred_region
      %s25 = ssub.s32 2048, 2048
      %26 = vsyncadd [#allocation6], %s25
      %s27 = sshll.u32 [#allocation5], 4
      %s28 = int_to_ptr.vmem [resolvable:$true] %s27
      %33 = dma.hbm_to_vmem [thread:$0]  %s1, 2048, %s28, [#allocation6], 64, 64, 4
    $region9: #{tpu_custom_call.1} parent=1 // pred_fallthru
      _
    // Predicated region
    $region10: #{tpu_custom_call.1} parent=1 // pred_check
      _
    $region11: #{tpu_custom_call.1} parent=1 // pred_check_branch
      %35 = sbr.rel (0) target = $region13
    $region12: #{tpu_custom_call.1} parent=1 // pred_region
      %36 = dma.done [#allocation3], 4096
    $region13: #{tpu_custom_call.1} parent=1 // pred_fallthru
      _
    // Predicated region
    $region14: #{tpu_custom_call.1} parent=1 // pred_check
      _
    $region15: #{tpu_custom_call.1} parent=1 // pred_check_branch
      %38 = sbr.rel (0) target = $region17
    $region16: #{tpu_custom_call.1} parent=1 // pred_region
      %39 = dma.done [#allocation6], 2048
    $region17: #{tpu_custom_call.1} parent=1 // pred_fallthru
      _
    %v41 = vld [vmem:[#allocation2] sm:$0xff]
    %v42 = vld [vmem:[#allocation2 + $0x8] sm:$0xff]
    %v43 = vld [vmem:[#allocation2 + $0x10] sm:$0xff]
    %v44 = vld [vmem:[#allocation2 + $0x18] sm:$0xff]
    %v45 = vld [vmem:[#allocation2 + $0x20] sm:$0xff]
    %v46 = vld [vmem:[#allocation2 + $0x28] sm:$0xff]
    %v47 = vld [vmem:[#allocation2 + $0x30] sm:$0xff]
    %v48 = vld [vmem:[#allocation2 + $0x38] sm:$0xff]
    %v49 = vld [vmem:[#allocation2 + $0x40] sm:$0xff]
    %v50 = vld [vmem:[#allocation2 + $0x48] sm:$0xff]
    %v51 = vld [vmem:[#allocation2 + $0x50] sm:$0xff]
    %v52 = vld [vmem:[#allocation2 + $0x58] sm:$0xff]
    %v53 = vld [vmem:[#allocation2 + $0x60] sm:$0xff]
    %v54 = vld [vmem:[#allocation2 + $0x68] sm:$0xff]
    %v55 = vld [vmem:[#allocation2 + $0x70] sm:$0xff]
    %v56 = vld [vmem:[#allocation2 + $0x78] sm:$0xff]
    %v57 = vld [vmem:[#allocation2 + $0x80] sm:$0xff]
    %v58 = vld [vmem:[#allocation2 + $0x88] sm:$0xff]
    %v59 = vld [vmem:[#allocation2 + $0x90] sm:$0xff]
    %v60 = vld [vmem:[#allocation2 + $0x98] sm:$0xff]
    %v61 = vld [vmem:[#allocation2 + $0xa0] sm:$0xff]
    %v62 = vld [vmem:[#allocation2 + $0xa8] sm:$0xff]
    %v63 = vld [vmem:[#allocation2 + $0xb0] sm:$0xff]
    %v64 = vld [vmem:[#allocation2 + $0xb8] sm:$0xff]
    %v65 = vld [vmem:[#allocation2 + $0xc0] sm:$0xff]
    %v66 = vld [vmem:[#allocation2 + $0xc8] sm:$0xff]
    %v67 = vld [vmem:[#allocation2 + $0xd0] sm:$0xff]
    %v68 = vld [vmem:[#allocation2 + $0xd8] sm:$0xff]
    %v69 = vld [vmem:[#allocation2 + $0xe0] sm:$0xff]
    %v70 = vld [vmem:[#allocation2 + $0xe8] sm:$0xff]
    %v71 = vld [vmem:[#allocation2 + $0xf0] sm:$0xff]
    %v72 = vld [vmem:[#allocation2 + $0xf8] sm:$0xff]
    %v73 = vld [vmem:[#allocation5] sm:$0xf]
    %v74 = vld [vmem:[#allocation5 + $0x4] sm:$0xf]
    %v75 = vld [vmem:[#allocation5 + $0x8] sm:$0xf]
    %v76 = vld [vmem:[#allocation5 + $0xc] sm:$0xf]
    %v77 = vld [vmem:[#allocation5 + $0x10] sm:$0xf]
    %v78 = vld [vmem:[#allocation5 + $0x14] sm:$0xf]
    %v79 = vld [vmem:[#allocation5 + $0x18] sm:$0xf]
    %v80 = vld [vmem:[#allocation5 + $0x1c] sm:$0xf]
    %v81 = vld [vmem:[#allocation5 + $0x20] sm:$0xf]
    %v82 = vld [vmem:[#allocation5 + $0x24] sm:$0xf]
    %v83 = vld [vmem:[#allocation5 + $0x28] sm:$0xf]
    %v84 = vld [vmem:[#allocation5 + $0x2c] sm:$0xf]
    %v85 = vld [vmem:[#allocation5 + $0x30] sm:$0xf]
    %v86 = vld [vmem:[#allocation5 + $0x34] sm:$0xf]
    %v87 = vld [vmem:[#allocation5 + $0x38] sm:$0xf]
    %v88 = vld [vmem:[#allocation5 + $0x3c] sm:$0xf]
    %v89 = vld [vmem:[#allocation5 + $0x40] sm:$0xf]
    %v90 = vld [vmem:[#allocation5 + $0x44] sm:$0xf]
    %v91 = vld [vmem:[#allocation5 + $0x48] sm:$0xf]
    %v92 = vld [vmem:[#allocation5 + $0x4c] sm:$0xf]
    %v93 = vld [vmem:[#allocation5 + $0x50] sm:$0xf]
    %v94 = vld [vmem:[#allocation5 + $0x54] sm:$0xf]
    %v95 = vld [vmem:[#allocation5 + $0x58] sm:$0xf]
    %v96 = vld [vmem:[#allocation5 + $0x5c] sm:$0xf]
    %v97 = vld [vmem:[#allocation5 + $0x60] sm:$0xf]
    %v98 = vld [vmem:[#allocation5 + $0x64] sm:$0xf]
    %v99 = vld [vmem:[#allocation5 + $0x68] sm:$0xf]
    %v100 = vld [vmem:[#allocation5 + $0x6c] sm:$0xf]
    %v101 = vld [vmem:[#allocation5 + $0x70] sm:$0xf]
    %v102 = vld [vmem:[#allocation5 + $0x74] sm:$0xf]
    %v103 = vld [vmem:[#allocation5 + $0x78] sm:$0xf]
    %v104 = vld [vmem:[#allocation5 + $0x7c] sm:$0xf]
    %v137 = vunpack.c.l.b16 %v41
    %v138 = vunpack.c.h.b16 %v41
    %v139 = vunpack.c.l.b16 %v42
    %v140 = vunpack.c.h.b16 %v42
    %v141 = vunpack.c.l.b16 %v43
    %v142 = vunpack.c.h.b16 %v43
    %v143 = vunpack.c.l.b16 %v44
    %v144 = vunpack.c.h.b16 %v44
    %v145 = vunpack.c.l.b16 %v45
    %v146 = vunpack.c.h.b16 %v45
    %v147 = vunpack.c.l.b16 %v46
    %v148 = vunpack.c.h.b16 %v46
    %v149 = vunpack.c.l.b16 %v47
    %v150 = vunpack.c.h.b16 %v47
    %v151 = vunpack.c.l.b16 %v48
    %v152 = vunpack.c.h.b16 %v48
    %v153 = vunpack.c.l.b16 %v49
    %v154 = vunpack.c.h.b16 %v49
    %v155 = vunpack.c.l.b16 %v50
    %v156 = vunpack.c.h.b16 %v50
    %v157 = vunpack.c.l.b16 %v51
    %v158 = vunpack.c.h.b16 %v51
    %v159 = vunpack.c.l.b16 %v52
    %v160 = vunpack.c.h.b16 %v52
    %v161 = vunpack.c.l.b16 %v53
    %v162 = vunpack.c.h.b16 %v53
    %v163 = vunpack.c.l.b16 %v54
    %v164 = vunpack.c.h.b16 %v54
    %v165 = vunpack.c.l.b16 %v55
    %v166 = vunpack.c.h.b16 %v55
    %v167 = vunpack.c.l.b16 %v56
    %v168 = vunpack.c.h.b16 %v56
    %v169 = vunpack.c.l.b16 %v57
    %v170 = vunpack.c.h.b16 %v57
    %v171 = vunpack.c.l.b16 %v58
    %v172 = vunpack.c.h.b16 %v58
    %v173 = vunpack.c.l.b16 %v59
    %v174 = vunpack.c.h.b16 %v59
    %v175 = vunpack.c.l.b16 %v60
    %v176 = vunpack.c.h.b16 %v60
    %v177 = vunpack.c.l.b16 %v61
    %v178 = vunpack.c.h.b16 %v61
    %v179 = vunpack.c.l.b16 %v62
    %v180 = vunpack.c.h.b16 %v62
    %v181 = vunpack.c.l.b16 %v63
    %v182 = vunpack.c.h.b16 %v63
    %v183 = vunpack.c.l.b16 %v64
    %v184 = vunpack.c.h.b16 %v64
    %v185 = vunpack.c.l.b16 %v65
    %v186 = vunpack.c.h.b16 %v65
    %v187 = vunpack.c.l.b16 %v66
    %v188 = vunpack.c.h.b16 %v66
    %v189 = vunpack.c.l.b16 %v67
    %v190 = vunpack.c.h.b16 %v67
    %v191 = vunpack.c.l.b16 %v68
    %v192 = vunpack.c.h.b16 %v68
    %v193 = vunpack.c.l.b16 %v69
    %v194 = vunpack.c.h.b16 %v69
    %v195 = vunpack.c.l.b16 %v70
    %v196 = vunpack.c.h.b16 %v70
    %v197 = vunpack.c.l.b16 %v71
    %v198 = vunpack.c.h.b16 %v71
    %v199 = vunpack.c.l.b16 %v72
    %v200 = vunpack.c.h.b16 %v72
    %v201 = vpack.c.b16 %v139, %v137
    %v202 = vpack.c.b16 %v140, %v138
    %v203 = vpack.c.b16 %v143, %v141
    %v204 = vpack.c.b16 %v144, %v142
    %v205 = vpack.c.b16 %v147, %v145
    %v206 = vpack.c.b16 %v148, %v146
    %v207 = vpack.c.b16 %v151, %v149
    %v208 = vpack.c.b16 %v152, %v150
    %v209 = vpack.c.b16 %v155, %v153
    %v210 = vpack.c.b16 %v156, %v154
    %v211 = vpack.c.b16 %v159, %v157
    %v212 = vpack.c.b16 %v160, %v158
    %v213 = vpack.c.b16 %v163, %v161
    %v214 = vpack.c.b16 %v164, %v162
    %v215 = vpack.c.b16 %v167, %v165
    %v216 = vpack.c.b16 %v168, %v166
    %v217 = vpack.c.b16 %v171, %v169
    %v218 = vpack.c.b16 %v172, %v170
    %v219 = vpack.c.b16 %v175, %v173
    %v220 = vpack.c.b16 %v176, %v174
    %v221 = vpack.c.b16 %v179, %v177
    %v222 = vpack.c.b16 %v180, %v178
    %v223 = vpack.c.b16 %v183, %v181
    %v224 = vpack.c.b16 %v184, %v182
    %v225 = vpack.c.b16 %v187, %v185
    %v226 = vpack.c.b16 %v188, %v186
    %v227 = vpack.c.b16 %v191, %v189
    %v228 = vpack.c.b16 %v192, %v190
    %v229 = vpack.c.b16 %v195, %v193
    %v230 = vpack.c.b16 %v196, %v194
    %v231 = vpack.c.b16 %v199, %v197
    %v232 = vpack.c.b16 %v200, %v198
    %v297 = vunpack.c.l.b16 %v73
    %v298 = vunpack.c.l.b16 %v74
    %v299 = vunpack.c.l.b16 %v75
    %v300 = vunpack.c.l.b16 %v76
    %v301 = vunpack.c.l.b16 %v77
    %v302 = vunpack.c.l.b16 %v78
    %v303 = vunpack.c.l.b16 %v79
    %v304 = vunpack.c.l.b16 %v80
    %v305 = vunpack.c.l.b16 %v81
    %v306 = vunpack.c.l.b16 %v82
    %v307 = vunpack.c.l.b16 %v83
    %v308 = vunpack.c.l.b16 %v84
    %v309 = vunpack.c.l.b16 %v85
    %v310 = vunpack.c.l.b16 %v86
    %v311 = vunpack.c.l.b16 %v87
    %v312 = vunpack.c.l.b16 %v88
    %v313 = vunpack.c.l.b16 %v89
    %v314 = vunpack.c.l.b16 %v90
    %v315 = vunpack.c.l.b16 %v91
    %v316 = vunpack.c.l.b16 %v92
    %v317 = vunpack.c.l.b16 %v93
    %v318 = vunpack.c.l.b16 %v94
    %v319 = vunpack.c.l.b16 %v95
    %v320 = vunpack.c.l.b16 %v96
    %v321 = vunpack.c.l.b16 %v97
    %v322 = vunpack.c.l.b16 %v98
    %v323 = vunpack.c.l.b16 %v99
    %v324 = vunpack.c.l.b16 %v100
    %v325 = vunpack.c.l.b16 %v101
    %v326 = vunpack.c.l.b16 %v102
    %v327 = vunpack.c.l.b16 %v103
    %v328 = vunpack.c.l.b16 %v104
    %v329 = vpack.c.b16 %v298, %v297
    %v330 = vpack.c.b16 %v300, %v299
    %v331 = vpack.c.b16 %v302, %v301
    %v332 = vpack.c.b16 %v304, %v303
    %v333 = vpack.c.b16 %v306, %v305
    %v334 = vpack.c.b16 %v308, %v307
    %v335 = vpack.c.b16 %v310, %v309
    %v336 = vpack.c.b16 %v312, %v311
    %v337 = vpack.c.b16 %v314, %v313
    %v338 = vpack.c.b16 %v316, %v315
    %v339 = vpack.c.b16 %v318, %v317
    %v340 = vpack.c.b16 %v320, %v319
    %v341 = vpack.c.b16 %v322, %v321
    %v342 = vpack.c.b16 %v324, %v323
    %v343 = vpack.c.b16 %v326, %v325
    %v344 = vpack.c.b16 %v328, %v327
    %361 = vmatprep.subr.bf16.mxu0 0
    %362 = vmatpush1.bf16.msra.mxu0 %v329
    %363 = vmatprep.subr.bf16.mxu0 0
    %364 = vmatpush1.bf16.msra.mxu0 %v330
    %365 = vmatprep.subr.bf16.mxu0 0
    %366 = vmatpush1.bf16.msra.mxu0 %v331
    %367 = vmatprep.subr.bf16.mxu0 0
    %368 = vmatpush1.bf16.msra.mxu0 %v332
    %369 = vmatprep.subr.bf16.mxu0 0
    %370 = vmatpush1.bf16.msra.mxu0 %v333
    %371 = vmatprep.subr.bf16.mxu0 0
    %372 = vmatpush1.bf16.msra.mxu0 %v334
    %373 = vmatprep.subr.bf16.mxu0 0
    %374 = vmatpush1.bf16.msra.mxu0 %v335
    %375 = vmatprep.subr.bf16.mxu0 0
    %376 = vmatpush1.bf16.msra.mxu0 %v336
    %377 = vmatprep.subr.bf16.mxu0 0
    %378 = vmatpush1.bf16.msra.mxu0 %v337
    %379 = vmatprep.subr.bf16.mxu0 0
    %380 = vmatpush1.bf16.msra.mxu0 %v338
    %381 = vmatprep.subr.bf16.mxu0 0
    %382 = vmatpush1.bf16.msra.mxu0 %v339
    %383 = vmatprep.subr.bf16.mxu0 0
    %384 = vmatpush1.bf16.msra.mxu0 %v340
    %385 = vmatprep.subr.bf16.mxu0 0
    %386 = vmatpush1.bf16.msra.mxu0 %v341
    %387 = vmatprep.subr.bf16.mxu0 0
    %388 = vmatpush1.bf16.msra.mxu0 %v342
    %389 = vmatprep.subr.bf16.mxu0 0
    %390 = vmatpush1.bf16.msra.mxu0 %v343
    %391 = vmatprep.subr.bf16.mxu0 0
    %392 = vmatpush1.bf16.msra.mxu0 %v344
    %393 = vmatprep.mubr.bf16.mxu0 %v202
    %394 = vmatmul.mubr.bf16.gmra.mrb[0].mxu0 %v201
    %v395 = vpop.f32.mrb[0].mxu0
    %v396 = vadd.f32 0.0, %v395
    %v397 = vpop.f32.mrb[0].mxu0
    %v398 = vpop.f32.mrb[0].mxu0
    %v399 = vadd.f32 0.0, %v398
    %v400 = vpop.f32.mrb[0].mxu0
    %401 = vmatprep.mubr.bf16.mxu0 %v204
    %402 = vmatmul.mubr.bf16.gmra.mrb[0].mxu0 %v203
    %v403 = vpop.f32.mrb[0].mxu0
    %v404 = vadd.f32 0.0, %v403
    %v405 = vpop.f32.mrb[0].mxu0
    %v406 = vpop.f32.mrb[0].mxu0
    %v407 = vadd.f32 0.0, %v406
    %v408 = vpop.f32.mrb[0].mxu0
    %409 = vmatprep.mubr.bf16.mxu0 %v206
    %410 = vmatmul.mubr.bf16.gmra.mrb[0].mxu0 %v205
    %v411 = vpop.f32.mrb[0].mxu0
    %v412 = vadd.f32 0.0, %v411
    %v413 = vpop.f32.mrb[0].mxu0
    %v414 = vpop.f32.mrb[0].mxu0
    %v415 = vadd.f32 0.0, %v414
    %v416 = vpop.f32.mrb[0].mxu0
    %417 = vmatprep.mubr.bf16.mxu0 %v208
    %418 = vmatmul.mubr.bf16.gmra.mrb[0].mxu0 %v207
    %v419 = vpop.f32.mrb[0].mxu0
    %v420 = vadd.f32 0.0, %v419
    %v421 = vpop.f32.mrb[0].mxu0
    %v422 = vpop.f32.mrb[0].mxu0
    %v423 = vadd.f32 0.0, %v422
    %v424 = vpop.f32.mrb[0].mxu0
    %425 = vmatprep.mubr.bf16.mxu0 %v210
    %426 = vmatmul.mubr.bf16.gmra.mrb[0].mxu0 %v209
    %v427 = vpop.f32.mrb[0].mxu0
    %v428 = vadd.f32 0.0, %v427
    %v429 = vpop.f32.mrb[0].mxu0
    %v430 = vpop.f32.mrb[0].mxu0
    %v431 = vadd.f32 0.0, %v430
    %v432 = vpop.f32.mrb[0].mxu0
    %433 = vmatprep.mubr.bf16.mxu0 %v212
    %434 = vmatmul.mubr.bf16.gmra.mrb[0].mxu0 %v211
    %v435 = vpop.f32.mrb[0].mxu0
    %v436 = vadd.f32 0.0, %v435
    %v437 = vpop.f32.mrb[0].mxu0
    %v438 = vpop.f32.mrb[0].mxu0
    %v439 = vadd.f32 0.0, %v438
    %v440 = vpop.f32.mrb[0].mxu0
    %441 = vmatprep.mubr.bf16.mxu0 %v214
    %442 = vmatmul.mubr.bf16.gmra.mrb[0].mxu0 %v213
    %v443 = vpop.f32.mrb[0].mxu0
    %v444 = vadd.f32 0.0, %v443
    %v445 = vpop.f32.mrb[0].mxu0
    %v446 = vpop.f32.mrb[0].mxu0
    %v447 = vadd.f32 0.0, %v446
    %v448 = vpop.f32.mrb[0].mxu0
    %449 = vmatprep.mubr.bf16.mxu0 %v216
    %450 = vmatmul.mubr.bf16.gmra.mrb[0].mxu0 %v215
    %v451 = vpop.f32.mrb[0].mxu0
    %v452 = vadd.f32 0.0, %v451
    %v453 = vpop.f32.mrb[0].mxu0
    %v454 = vpop.f32.mrb[0].mxu0
    %v455 = vadd.f32 0.0, %v454
    %v456 = vpop.f32.mrb[0].mxu0
    %457 = vmatprep.mubr.bf16.mxu0 %v218
    %458 = vmatmul.mubr.bf16.gmra.mrb[0].mxu0 %v217
    %v459 = vpop.f32.mrb[0].mxu0
    %v460 = vadd.f32 0.0, %v459
    %v461 = vpop.f32.mrb[0].mxu0
    %v462 = vpop.f32.mrb[0].mxu0
    %v463 = vadd.f32 0.0, %v462
    %v464 = vpop.f32.mrb[0].mxu0
    %465 = vmatprep.mubr.bf16.mxu0 %v220
    %466 = vmatmul.mubr.bf16.gmra.mrb[0].mxu0 %v219
    %v467 = vpop.f32.mrb[0].mxu0
    %v468 = vadd.f32 0.0, %v467
    %v469 = vpop.f32.mrb[0].mxu0
    %v470 = vpop.f32.mrb[0].mxu0
    %v471 = vadd.f32 0.0, %v470
    %v472 = vpop.f32.mrb[0].mxu0
    %473 = vmatprep.mubr.bf16.mxu0 %v222
    %474 = vmatmul.mubr.bf16.gmra.mrb[0].mxu0 %v221
    %v475 = vpop.f32.mrb[0].mxu0
    %v476 = vadd.f32 0.0, %v475
    %v477 = vpop.f32.mrb[0].mxu0
    %v478 = vpop.f32.mrb[0].mxu0
    %v479 = vadd.f32 0.0, %v478
    %v480 = vpop.f32.mrb[0].mxu0
    %481 = vmatprep.mubr.bf16.mxu0 %v224
    %482 = vmatmul.mubr.bf16.gmra.mrb[0].mxu0 %v223
    %v483 = vpop.f32.mrb[0].mxu0
    %v484 = vadd.f32 0.0, %v483
    %v485 = vpop.f32.mrb[0].mxu0
    %v486 = vpop.f32.mrb[0].mxu0
    %v487 = vadd.f32 0.0, %v486
    %v488 = vpop.f32.mrb[0].mxu0
    %489 = vmatprep.mubr.bf16.mxu0 %v226
    %490 = vmatmul.mubr.bf16.gmra.mrb[0].mxu0 %v225
    %v491 = vpop.f32.mrb[0].mxu0
    %v492 = vadd.f32 0.0, %v491
    %v493 = vpop.f32.mrb[0].mxu0
    %v494 = vpop.f32.mrb[0].mxu0
    %v495 = vadd.f32 0.0, %v494
    %v496 = vpop.f32.mrb[0].mxu0
    %497 = vmatprep.mubr.bf16.mxu0 %v228
    %498 = vmatmul.mubr.bf16.gmra.mrb[0].mxu0 %v227
    %v499 = vpop.f32.mrb[0].mxu0
    %v500 = vadd.f32 0.0, %v499
    %v501 = vpop.f32.mrb[0].mxu0
    %v502 = vpop.f32.mrb[0].mxu0
    %v503 = vadd.f32 0.0, %v502
    %v504 = vpop.f32.mrb[0].mxu0
    %505 = vmatprep.mubr.bf16.mxu0 %v230
    %506 = vmatmul.mubr.bf16.gmra.mrb[0].mxu0 %v229
    %v507 = vpop.f32.mrb[0].mxu0
    %v508 = vadd.f32 0.0, %v507
    %v509 = vpop.f32.mrb[0].mxu0
    %v510 = vpop.f32.mrb[0].mxu0
    %v511 = vadd.f32 0.0, %v510
    %v512 = vpop.f32.mrb[0].mxu0
    %513 = vmatprep.mubr.bf16.mxu0 %v232
    %514 = vmatmul.mubr.bf16.gmra.mrb[0].mxu0 %v231
    %v515 = vpop.f32.mrb[0].mxu0
    %v516 = vadd.f32 0.0, %v515
    %v517 = vpop.f32.mrb[0].mxu0
    %v518 = vpop.f32.mrb[0].mxu0
    %v519 = vadd.f32 0.0, %v518
    %v520 = vpop.f32.mrb[0].mxu0
    %521 = vdwg.mxu0
    %v522 = vpack.c.bf16 %v399, %v396
    %v523 = vpack.c.bf16 %v407, %v404
    %v524 = vpack.c.bf16 %v415, %v412
    %v525 = vpack.c.bf16 %v423, %v420
    %v526 = vpack.c.bf16 %v431, %v428
    %v527 = vpack.c.bf16 %v439, %v436
    %v528 = vpack.c.bf16 %v447, %v444
    %v529 = vpack.c.bf16 %v455, %v452
    %v530 = vpack.c.bf16 %v463, %v460
    %v531 = vpack.c.bf16 %v471, %v468
    %v532 = vpack.c.bf16 %v479, %v476
    %v533 = vpack.c.bf16 %v487, %v484
    %v534 = vpack.c.bf16 %v495, %v492
    %v535 = vpack.c.bf16 %v503, %v500
    %v536 = vpack.c.bf16 %v511, %v508
    %v537 = vpack.c.bf16 %v519, %v516
    %v554 = vunpack.c.l.b16 %v522
    %v555 = vunpack.c.h.b16 %v522
    %v556 = vunpack.c.l.b16 %v523
    %v557 = vunpack.c.h.b16 %v523
    %v558 = vunpack.c.l.b16 %v524
    %v559 = vunpack.c.h.b16 %v524
    %v560 = vunpack.c.l.b16 %v525
    %v561 = vunpack.c.h.b16 %v525
    %v562 = vunpack.c.l.b16 %v526
    %v563 = vunpack.c.h.b16 %v526
    %v564 = vunpack.c.l.b16 %v527
    %v565 = vunpack.c.h.b16 %v527
    %v566 = vunpack.c.l.b16 %v528
    %v567 = vunpack.c.h.b16 %v528
    %v568 = vunpack.c.l.b16 %v529
    %v569 = vunpack.c.h.b16 %v529
    %v570 = vunpack.c.l.b16 %v530
    %v571 = vunpack.c.h.b16 %v530
    %v572 = vunpack.c.l.b16 %v531
    %v573 = vunpack.c.h.b16 %v531
    %v574 = vunpack.c.l.b16 %v532
    %v575 = vunpack.c.h.b16 %v532
    %v576 = vunpack.c.l.b16 %v533
    %v577 = vunpack.c.h.b16 %v533
    %v578 = vunpack.c.l.b16 %v534
    %v579 = vunpack.c.h.b16 %v534
    %v580 = vunpack.c.l.b16 %v535
    %v581 = vunpack.c.h.b16 %v535
    %v582 = vunpack.c.l.b16 %v536
    %v583 = vunpack.c.h.b16 %v536
    %v584 = vunpack.c.l.b16 %v537
    %v585 = vunpack.c.h.b16 %v537
    %v586 = vpack.c.b16 %v554, %v554
    %v587 = vpack.c.b16 %v555, %v555
    %v588 = vpack.c.b16 %v556, %v556
    %v589 = vpack.c.b16 %v557, %v557
    %v590 = vpack.c.b16 %v558, %v558
    %v591 = vpack.c.b16 %v559, %v559
    %v592 = vpack.c.b16 %v560, %v560
    %v593 = vpack.c.b16 %v561, %v561
    %v594 = vpack.c.b16 %v562, %v562
    %v595 = vpack.c.b16 %v563, %v563
    %v596 = vpack.c.b16 %v564, %v564
    %v597 = vpack.c.b16 %v565, %v565
    %v598 = vpack.c.b16 %v566, %v566
    %v599 = vpack.c.b16 %v567, %v567
    %v600 = vpack.c.b16 %v568, %v568
    %v601 = vpack.c.b16 %v569, %v569
    %v602 = vpack.c.b16 %v570, %v570
    %v603 = vpack.c.b16 %v571, %v571
    %v604 = vpack.c.b16 %v572, %v572
    %v605 = vpack.c.b16 %v573, %v573
    %v606 = vpack.c.b16 %v574, %v574
    %v607 = vpack.c.b16 %v575, %v575
    %v608 = vpack.c.b16 %v576, %v576
    %v609 = vpack.c.b16 %v577, %v577
    %v610 = vpack.c.b16 %v578, %v578
    %v611 = vpack.c.b16 %v579, %v579
    %v612 = vpack.c.b16 %v580, %v580
    %v613 = vpack.c.b16 %v581, %v581
    %v614 = vpack.c.b16 %v582, %v582
    %v615 = vpack.c.b16 %v583, %v583
    %v616 = vpack.c.b16 %v584, %v584
    %v617 = vpack.c.b16 %v585, %v585
    %650 = vst [vmem:[#allocation7] sm:$0xf] %v586
    %651 = vst [vmem:[#allocation7 + $0x4] sm:$0xf] %v587
    %652 = vst [vmem:[#allocation7 + $0x8] sm:$0xf] %v588
    %653 = vst [vmem:[#allocation7 + $0xc] sm:$0xf] %v589
    %654 = vst [vmem:[#allocation7 + $0x10] sm:$0xf] %v590
    %655 = vst [vmem:[#allocation7 + $0x14] sm:$0xf] %v591
    %656 = vst [vmem:[#allocation7 + $0x18] sm:$0xf] %v592
    %657 = vst [vmem:[#allocation7 + $0x1c] sm:$0xf] %v593
    %658 = vst [vmem:[#allocation7 + $0x20] sm:$0xf] %v594
    %659 = vst [vmem:[#allocation7 + $0x24] sm:$0xf] %v595
    %660 = vst [vmem:[#allocation7 + $0x28] sm:$0xf] %v596
    %661 = vst [vmem:[#allocation7 + $0x2c] sm:$0xf] %v597
    %662 = vst [vmem:[#allocation7 + $0x30] sm:$0xf] %v598
    %663 = vst [vmem:[#allocation7 + $0x34] sm:$0xf] %v599
    %664 = vst [vmem:[#allocation7 + $0x38] sm:$0xf] %v600
    %665 = vst [vmem:[#allocation7 + $0x3c] sm:$0xf] %v601
    %666 = vst [vmem:[#allocation7 + $0x40] sm:$0xf] %v602
    %667 = vst [vmem:[#allocation7 + $0x44] sm:$0xf] %v603
    %668 = vst [vmem:[#allocation7 + $0x48] sm:$0xf] %v604
    %669 = vst [vmem:[#allocation7 + $0x4c] sm:$0xf] %v605
    %670 = vst [vmem:[#allocation7 + $0x50] sm:$0xf] %v606
    %671 = vst [vmem:[#allocation7 + $0x54] sm:$0xf] %v607
    %672 = vst [vmem:[#allocation7 + $0x58] sm:$0xf] %v608
    %673 = vst [vmem:[#allocation7 + $0x5c] sm:$0xf] %v609
    %674 = vst [vmem:[#allocation7 + $0x60] sm:$0xf] %v610
    %675 = vst [vmem:[#allocation7 + $0x64] sm:$0xf] %v611
    %676 = vst [vmem:[#allocation7 + $0x68] sm:$0xf] %v612
    %677 = vst [vmem:[#allocation7 + $0x6c] sm:$0xf] %v613
    %678 = vst [vmem:[#allocation7 + $0x70] sm:$0xf] %v614
    %679 = vst [vmem:[#allocation7 + $0x74] sm:$0xf] %v615
    %680 = vst [vmem:[#allocation7 + $0x78] sm:$0xf] %v616
    %681 = vst [vmem:[#allocation7 + $0x7c] sm:$0xf] %v617
    // Predicated region
    $region18: #{tpu_custom_call.1} parent=1 // pred_check
      _
    $region19: #{tpu_custom_call.1} parent=1 // pred_check_branch
      %683 = sbr.rel (0) target = $region21
    $region20: #{tpu_custom_call.1} parent=1 // pred_region
      %s685 = ssub.s32 2048, 2048
      %686 = vsyncadd [#allocation4], %s685
      %s687 = sshll.u32 [#allocation7], 4
      %s688 = int_to_ptr.vmem [resolvable:$true] %s687
      %693 = dma.vmem_to_hbm [thread:$0]  %s688, 2048, %s2, [#allocation4], 64, 64, 4
    $region21: #{tpu_custom_call.1} parent=1 // pred_fallthru
      _
    // Predicated region
    $region22: #{tpu_custom_call.1} parent=1 // pred_check
      _
    $region23: #{tpu_custom_call.1} parent=1 // pred_check_branch
      %695 = sbr.rel (0) target = $region25
    $region24: #{tpu_custom_call.1} parent=1 // pred_region
      %696 = dma.done [#allocation4], 2048
    $region25: #{tpu_custom_call.1} parent=1 // pred_fallthru
      _
    %697 = vsyncpa [#allocation3], 1
    %698 = vsyncpa [#allocation6], 1
    %699 = vsyncpa [#allocation4], 1

</llo_original>
